<compile_context>
chip_gen: v7x
topology: tpu7x:2x2x1
jax: 0.10.0
libtpu: 0.0.40
codegen_flags: <defaults>
</compile_context>

<pallas_src>
import jax
import jax.numpy as jnp
from jax.experimental import pallas as pl
from jax.experimental.pallas import tpu as pltpu

LANE = 128


def _round_up(v, m):
    return (v + m - 1) // m * m


# ---------------------------------------------------------------------------
# Pass 1 (K-split): acc += A_blk @ xw1s_blk ; on last k:
#   h    = relu(acc * dinv_row + b1)
#   out  = (h @ W2) * dinv_row     stored bf16, lane-dense
# (xw1s already carries layer-1's column-side D^-1/2; multiplying the stored
#  intermediate by dinv_row pre-applies layer-2's column-side D^-1/2.)
# ---------------------------------------------------------------------------
def gcn_layer1_kernel(adj_ref, dinv_row_ref, xw1_ref, b1_ref, w2_ref,
                      hw2_ref, acc_ref):
    k = pl.program_id(1)

    @pl.when(k == 0)
    def _():
        acc_ref[...] = jnp.zeros_like(acc_ref)

    acc_ref[...] += jnp.dot(adj_ref[...], xw1_ref[...],
                            preferred_element_type=jnp.float32)

    @pl.when(k == pl.num_programs(1) - 1)
    def _():
        # TODO(synk): dropout is eval-mode identity (training=False); a training
        # variant would draw a mask via pltpu.prng_seed / pltpu.prng_random_bits.
        h = jnp.maximum(acc_ref[...] * dinv_row_ref[...] + b1_ref[...], 0.0)
        hw2 = jnp.dot(h.astype(jnp.bfloat16), w2_ref[...],
                      preferred_element_type=jnp.float32)
        hw2_ref[...] = (hw2 * dinv_row_ref[...]).astype(jnp.bfloat16)


# ---------------------------------------------------------------------------
# Pass 2 (K-split): acc += A_blk @ hw2s_blk ; on last k:
#   out = acc * dinv_row + b2
# ---------------------------------------------------------------------------
def gcn_layer2_kernel(adj_ref, dinv_row_ref, hw2_ref, b2_ref, out_ref, acc_ref):
    k = pl.program_id(1)

    @pl.when(k == 0)
    def _():
        acc_ref[...] = jnp.zeros_like(acc_ref)

    acc_ref[...] += jnp.dot(adj_ref[...], hw2_ref[...],
                            preferred_element_type=jnp.float32)

    @pl.when(k == pl.num_programs(1) - 1)
    def _():
        out_ref[...] = acc_ref[...] * dinv_row_ref[...] + b2_ref[...]


# ---------------------------------------------------------------------------
# Adjacency build: dense A_hat directly in bf16 (0/1/small ints are exact).
# ---------------------------------------------------------------------------
def _build_adjacency(edge_index, n, n_pad):
    src = edge_index[0].astype(jnp.int32)
    dst = edge_index[1].astype(jnp.int32)
    # Messages flow source -> target: A[target, source] accumulates edge weight.
    ones = jnp.ones(src.shape, jnp.bfloat16)
    a = jnp.zeros((n_pad, n_pad), jnp.bfloat16).at[dst, src].add(ones)
    # add_remaining_self_loops: only real nodes lacking a self-loop get one.
    idx = jnp.arange(n_pad)
    need_loop = (jnp.diagonal(a) == 0) & (idx < n)
    a = a.at[idx, idx].add(jnp.where(need_loop, 1.0, 0.0).astype(jnp.bfloat16))
    deg = jnp.sum(a, axis=1, dtype=jnp.float32)
    d_inv_sqrt = jnp.where(deg > 0, jax.lax.rsqrt(deg), 0.0)
    # TODO(synk): on v7x (fp8 MXU) the adjacency could be stored fp8_e4m3 to
    # halve the dominant N^2-byte HBM stream; kept bf16 here (untested path).
    return a, d_inv_sqrt.reshape(n_pad, 1).astype(jnp.float32)


# ---------------------------------------------------------------------------
# Generation-aware tile plan.
# ---------------------------------------------------------------------------
def _plan_tiling(n):
    try:
        vmem_bytes = int(getattr(pltpu.get_tpu_info(), "vmem_capacity_bytes",
                                 128 * 1024 * 1024))
    except Exception:
        vmem_bytes = 128 * 1024 * 1024
    if vmem_bytes <= 64 * 1024 * 1024:          # v7x: 64 MiB VMEM, 2 TCs/chip
        tm_target, vmem_limit = 256, 48 * 1024 * 1024
    else:                                        # v5e / v6e: 128 MiB VMEM
        tm_target, vmem_limit = 512, 100 * 1024 * 1024
    if n <= tm_target:
        # Small graph: single K step, but >=2 row tiles so both v7x TCs get work.
        n_pad = _round_up(max(n, 16), 16)
        tm = n_pad // 2                          # multiple of 8
        tk = n_pad                               # block dim == full dim
    else:
        tm = tm_target
        tk = 2 * tm                              # K-split bounds per-buffer VMEM
        n_pad = _round_up(n, tk)
    return tm, tk, n_pad, vmem_limit


def simple_gcn_forward(x, edge_index, w1, b1, w2, b2):
    """x: [N, F_in] f32, edge_index: [2, E] int32 -> [N, out_dim] f32."""
    n, f_in = x.shape
    hidden = w1.shape[1]
    out_dim = w2.shape[1]
    h_pad = _round_up(hidden, LANE)              # lane-dense hidden
    out_pad = _round_up(out_dim, LANE)           # lane-dense output

    tm, tk, n_pad, vmem_limit = _plan_tiling(n)
    num_tiles = n_pad // tm
    num_k = n_pad // tk

    adj_bf16, d_inv_sqrt = _build_adjacency(edge_index, n, n_pad)

    # Hoisted, grid-invariant feature transform: (D^-1/2 x) @ W1, padded + bf16.
    x_p = jnp.zeros((n_pad, f_in), jnp.float32).at[:n, :].set(x.astype(jnp.float32))
    w1_p = jnp.zeros((f_in, h_pad), jnp.float32).at[:, :hidden].set(
        w1.astype(jnp.float32))
    xw1s = ((x_p * d_inv_sqrt) @ w1_p).astype(jnp.bfloat16)       # (n_pad, h_pad)

    b1_p = jnp.zeros((1, h_pad), jnp.float32).at[:, :hidden].set(
        b1.reshape(1, hidden).astype(jnp.float32))
    w2_p = jnp.zeros((h_pad, out_pad), jnp.bfloat16).at[:hidden, :out_dim].set(
        w2.astype(jnp.bfloat16))
    b2_p = jnp.zeros((1, out_pad), jnp.float32).at[:, :out_dim].set(
        b2.reshape(1, out_dim).astype(jnp.float32))

    cparams = pltpu.CompilerParams(
        dimension_semantics=("parallel", "arbitrary"),
        vmem_limit_bytes=vmem_limit,
    )

    # ---- pass 1: hw2s = ((relu(S*(A @ xw1s) + b1)) @ W2) * S, bf16 lane-dense ----
    hw2s = pl.pallas_call(
        gcn_layer1_kernel,
        out_shape=jax.ShapeDtypeStruct((n_pad, out_pad), jnp.bfloat16),
        grid=(num_tiles, num_k),
        in_specs=[
            pl.BlockSpec((tm, tk), lambda i, k: (i, k)),           # A_hat block
            pl.BlockSpec((tm, 1), lambda i, k: (i, 0)),            # d^-1/2 rows
            pl.BlockSpec((tk, h_pad), lambda i, k: (k, 0)),        # (S x) W1
            pl.BlockSpec((1, h_pad), lambda i, k: (0, 0)),         # b1
            pl.BlockSpec((h_pad, out_pad), lambda i, k: (0, 0)),   # W2 (bf16, padded)
        ],
        out_specs=pl.BlockSpec((tm, out_pad), lambda i, k: (i, 0)),
        scratch_shapes=[pltpu.VMEM((tm, h_pad), jnp.float32)],
        compiler_params=cparams,
    )(adj_bf16, d_inv_sqrt, xw1s, b1_p, w2_p)

    # ---- pass 2: out = S * (A_hat @ hw2s) + b2 ----
    out_p = pl.pallas_call(
        gcn_layer2_kernel,
        out_shape=jax.ShapeDtypeStruct((n_pad, out_pad), jnp.float32),
        grid=(num_tiles, num_k),
        in_specs=[
            pl.BlockSpec((tm, tk), lambda i, k: (i, k)),           # A_hat block
            pl.BlockSpec((tm, 1), lambda i, k: (i, 0)),            # d^-1/2 rows
            pl.BlockSpec((tk, out_pad), lambda i, k: (k, 0)),      # hw2s blocks
            pl.BlockSpec((1, out_pad), lambda i, k: (0, 0)),       # b2
        ],
        out_specs=pl.BlockSpec((tm, out_pad), lambda i, k: (i, 0)),
        scratch_shapes=[pltpu.VMEM((tm, out_pad), jnp.float32)],
        compiler_params=cparams,
    )(adj_bf16, d_inv_sqrt, hw2s, b2_p)

    return out_p[:n, :out_dim]


# ---------------------------------------------------------------------------
# Pure-JAX f32 reference with identical graph semantics
# ---------------------------------------------------------------------------
def reference_forward(x, edge_index, w1, b1, w2, b2):
    n = x.shape[0]
    src, dst = edge_index[0], edge_index[1]
    a = jnp.zeros((n, n), jnp.float32).at[dst, src].add(1.0)
    idx = jnp.arange(n)
    a = a.at[idx, idx].add(jnp.where(jnp.diagonal(a) == 0.0, 1.0, 0.0))
    deg = jnp.sum(a, axis=1)
    dis = jnp.where(deg > 0, 1.0 / jnp.sqrt(deg), 0.0)
    na = dis[:, None] * a * dis[None, :]
    h = jnp.maximum(na @ (x @ w1) + b1, 0.0)
    return na @ (h @ w2) + b2


if __name__ == "__main__":
    # Small shapes consistent with the module: N nodes, node features.
    N, INPUT_DIM, HIDDEN_DIM, OUTPUT_DIM = 16, 8, 32, 4
    NUM_EDGES = 40

    key = jax.random.PRNGKey(0)
    kx, ke, kw1, kb1, kw2, kb2 = jax.random.split(key, 6)

    x = jax.random.normal(kx, (N, INPUT_DIM), dtype=jnp.float32)
    edge_index = jax.random.randint(ke, (2, NUM_EDGES), 0, N, dtype=jnp.int32)

    # Deterministic parameter init (Glorot-ish scaling).
    w1 = jax.random.normal(kw1, (INPUT_DIM, HIDDEN_DIM), jnp.float32) * (1.0 / INPUT_DIM ** 0.5)
    b1 = jax.random.normal(kb1, (HIDDEN_DIM,), jnp.float32) * 0.01
    w2 = jax.random.normal(kw2, (HIDDEN_DIM, OUTPUT_DIM), jnp.float32) * (1.0 / HIDDEN_DIM ** 0.5)
    b2 = jax.random.normal(kb2, (OUTPUT_DIM,), jnp.float32) * 0.01

    out = jax.block_until_ready(simple_gcn_forward(x, edge_index, w1, b1, w2, b2))
    ref = jax.block_until_ready(reference_forward(x, edge_index, w1, b1, w2, b2))

    assert out.shape == (N, OUTPUT_DIM), out.shape
    # bf16 MXU operands with f32 accumulation -> ~1% relative error vs pure-f32 ref.
    assert jnp.allclose(out, ref, atol=3e-2, rtol=3e-2), "mismatch vs reference"
    print("KERNEL_OK")
</pallas_src>

<mosaic_0001>
module attributes {stable_mosaic.version = 11 : i64} {
  func.func @gcn_layer1_kernel(%arg0: i32, %arg1: i32, %arg2: memref<8x16xbf16, #tpu.memory_space<vmem>>, %arg3: memref<8x1xf32, #tpu.memory_space<vmem>>, %arg4: memref<16x128xbf16, #tpu.memory_space<vmem>>, %arg5: memref<1x128xf32, #tpu.memory_space<vmem>>, %arg6: memref<128x128xbf16, #tpu.memory_space<vmem>>, %arg7: memref<8x128xbf16, #tpu.memory_space<vmem>>, %arg8: memref<8x128xf32, #tpu.memory_space<vmem>>) attributes {dimension_semantics = [#tpu.dimension_semantics<parallel>, #tpu.dimension_semantics<arbitrary>], iteration_bounds = array<i64: 2, 1>, scalar_prefetch = 0 : i64, scratch_operands = 1 : i64, tpu.core_type = #tpu.core_type<tc>, window_params = [{transform_indices = @transform_0, window_bounds = array<i64: 8, 16>}, {transform_indices = @transform_1, window_bounds = array<i64: 8, 1>}, {transform_indices = @transform_2, window_bounds = array<i64: 16, 128>}, {pipeline_mode = #tpu.pipeline_mode<synchronous>, transform_indices = @transform_3, window_bounds = array<i64: 1, 128>}, {pipeline_mode = #tpu.pipeline_mode<synchronous>, transform_indices = @transform_4, window_bounds = array<i64: 128, 128>}, {transform_indices = @transform_5, window_bounds = array<i64: 8, 128>}]} {
    %c0_i32 = arith.constant 0 : i32
    %0 = arith.cmpi eq, %arg1, %c0_i32 : i32
    %1 = arith.extui %0 : i1 to i32
    %c0_i32_0 = arith.constant 0 : i32
    %2 = arith.cmpi ne, %1, %c0_i32_0 : i32
    scf.if %2 {
      %cst_10 = arith.constant 0.000000e+00 : f32
      %12 = vector.broadcast %cst_10 : f32 to vector<8x128xf32>
      %c0_11 = arith.constant 0 : index
      %c0_12 = arith.constant 0 : index
      %13 = vector.load %arg8[%c0_11, %c0_12] : memref<8x128xf32, #tpu.memory_space<vmem>>, vector<8x128xf32>
      tpu.vector_store %arg8[%c0_11, %c0_12], %12 {strides = array<i32>} : memref<8x128xf32, #tpu.memory_space<vmem>>, vector<8x128xf32>,
    } else {
    }
    %c0 = arith.constant 0 : index
    %c0_1 = arith.constant 0 : index
    %3 = vector.load %arg8[%c0, %c0_1] : memref<8x128xf32, #tpu.memory_space<vmem>>, vector<8x128xf32>
    %c0_2 = arith.constant 0 : index
    %c0_3 = arith.constant 0 : index
    %4 = vector.load %arg2[%c0_2, %c0_3] : memref<8x16xbf16, #tpu.memory_space<vmem>>, vector<8x16xbf16>
    %c0_4 = arith.constant 0 : index
    %c0_5 = arith.constant 0 : index
    %5 = vector.load %arg4[%c0_4, %c0_5] : memref<16x128xbf16, #tpu.memory_space<vmem>>, vector<16x128xbf16>
    %cst = arith.constant dense<0.000000e+00> : vector<8x128xf32>
    %6 = tpu.matmul %4, %5, %cst {dimension_numbers = #tpu.dot_dimension_numbers<[1], [0], [0], [1], [0, 0, 1, 1], [], []>} : vector<8x16xbf16>, vector<16x128xbf16>, vector<8x128xf32> -> vector<8x128xf32>
    %7 = arith.addf %3, %6 : vector<8x128xf32>
    %c0_6 = arith.constant 0 : index
    %c0_7 = arith.constant 0 : index
    %8 = vector.load %arg8[%c0_6, %c0_7] : memref<8x128xf32, #tpu.memory_space<vmem>>, vector<8x128xf32>
    tpu.vector_store %arg8[%c0_6, %c0_7], %7 {strides = array<i32>} : memref<8x128xf32, #tpu.memory_space<vmem>>, vector<8x128xf32>,
    %c0_i32_8 = arith.constant 0 : i32
    %9 = arith.cmpi eq, %arg1, %c0_i32_8 : i32
    %10 = arith.extui %9 : i1 to i32
    %c0_i32_9 = arith.constant 0 : i32
    %11 = arith.cmpi ne, %10, %c0_i32_9 : i32
    scf.if %11 {
      %c0_10 = arith.constant 0 : index
      %c0_11 = arith.constant 0 : index
      %12 = vector.load %arg8[%c0_10, %c0_11] : memref<8x128xf32, #tpu.memory_space<vmem>>, vector<8x128xf32>
      %c0_12 = arith.constant 0 : index
      %c0_13 = arith.constant 0 : index
      %13 = vector.load %arg3[%c0_12, %c0_13] : memref<8x1xf32, #tpu.memory_space<vmem>>, vector<8x1xf32>
      %14 = vector.broadcast %13 : vector<8x1xf32> to vector<8x128xf32>
      %15 = arith.mulf %12, %14 : vector<8x128xf32>
      %c0_14 = arith.constant 0 : index
      %c0_15 = arith.constant 0 : index
      %16 = vector.load %arg5[%c0_14, %c0_15] : memref<1x128xf32, #tpu.memory_space<vmem>>, vector<1x128xf32>
      %17 = vector.broadcast %16 : vector<1x128xf32> to vector<8x128xf32>
      %18 = arith.addf %15, %17 : vector<8x128xf32>
      %cst_16 = arith.constant 0.000000e+00 : f32
      %19 = vector.broadcast %cst_16 : f32 to vector<8x128xf32>
      %20 = arith.maximumf %18, %19 : vector<8x128xf32>
      %21 = arith.truncf %20 : vector<8x128xf32> to vector<8x128xbf16>
      %c0_17 = arith.constant 0 : index
      %c0_18 = arith.constant 0 : index
      %22 = vector.load %arg6[%c0_17, %c0_18] : memref<128x128xbf16, #tpu.memory_space<vmem>>, vector<128x128xbf16>
      %cst_19 = arith.constant dense<0.000000e+00> : vector<8x128xf32>
      %23 = tpu.matmul %21, %22, %cst_19 {dimension_numbers = #tpu.dot_dimension_numbers<[1], [0], [0], [1], [0, 0, 1, 1], [], []>} : vector<8x128xbf16>, vector<128x128xbf16>, vector<8x128xf32> -> vector<8x128xf32>
      %c0_20 = arith.constant 0 : index
      %c0_21 = arith.constant 0 : index
      %24 = vector.load %arg3[%c0_20, %c0_21] : memref<8x1xf32, #tpu.memory_space<vmem>>, vector<8x1xf32>
      %25 = vector.broadcast %24 : vector<8x1xf32> to vector<8x128xf32>
      %26 = arith.mulf %23, %25 : vector<8x128xf32>
      %27 = arith.truncf %26 : vector<8x128xf32> to vector<8x128xbf16>
      %c0_22 = arith.constant 0 : index
      %c0_23 = arith.constant 0 : index
      %28 = vector.load %arg7[%c0_22, %c0_23] : memref<8x128xbf16, #tpu.memory_space<vmem>>, vector<8x128xbf16>
      tpu.vector_store %arg7[%c0_22, %c0_23], %27 {strides = array<i32>} : memref<8x128xbf16, #tpu.memory_space<vmem>>, vector<8x128xbf16>,
    } else {
    }
    return
  }
  func.func @transform_0(%arg0: i32, %arg1: i32) -> (i32, i32) {
    %c0_i32 = arith.constant 0 : i32
    return %arg0, %arg1 : i32, i32
  }
  func.func @transform_1(%arg0: i32, %arg1: i32) -> (i32, i32) {
    %c0_i32 = arith.constant 0 : i32
    %c0_i32_0 = arith.constant 0 : i32
    return %arg0, %c0_i32 : i32, i32
  }
  func.func @transform_2(%arg0: i32, %arg1: i32) -> (i32, i32) {
    %c0_i32 = arith.constant 0 : i32
    %c0_i32_0 = arith.constant 0 : i32
    return %arg1, %c0_i32 : i32, i32
  }
  func.func @transform_3(%arg0: i32, %arg1: i32) -> (i32, i32) {
    %c0_i32 = arith.constant 0 : i32
    %c0_i32_0 = arith.constant 0 : i32
    %c0_i32_1 = arith.constant 0 : i32
    return %c0_i32, %c0_i32_0 : i32, i32
  }
  func.func @transform_4(%arg0: i32, %arg1: i32) -> (i32, i32) {
    %c0_i32 = arith.constant 0 : i32
    %c0_i32_0 = arith.constant 0 : i32
    %c0_i32_1 = arith.constant 0 : i32
    return %c0_i32, %c0_i32_0 : i32, i32
  }
  func.func @transform_5(%arg0: i32, %arg1: i32) -> (i32, i32) {
    %c0_i32 = arith.constant 0 : i32
    %c0_i32_0 = arith.constant 0 : i32
    return %arg0, %c0_i32 : i32, i32
  }
}

</mosaic_0001>

<llo_original>
// kernel: tpu_custom_call.1
$region0: #{tpu_custom_call.1}
  #allocation0 [shape = 'u32[]', space=smem, size = 0x4, offset = 0x4, fixed_abs, tag = 'smem constant byte address 0x4 - core index']
  #allocation1 [shape = 'u32[144,128]{1,0:T(1,128)}', space=vmem, size = 0x12000, scoped, tag = 'internal scratch']
  #allocation2 [shape = 'f32[8,128]{1,0:T(8,128)}', space=vmem, size = 0x1000, scoped, tag = 'scratch operand']
  %s0 = inlined_call_operand.hbm [shape: bf16[16,16], index: 0, kind: input, shape index: {}]
  %s1 = inlined_call_operand.hbm [shape: f32[16,1], index: 1, kind: input, shape index: {}]
  %s2 = inlined_call_operand.hbm [shape: bf16[16,128], index: 2, kind: input, shape index: {}]
  %s3 = inlined_call_operand.hbm [shape: f32[1,128], index: 3, kind: input, shape index: {}]
  %s4 = inlined_call_operand.hbm [shape: bf16[128,128], index: 4, kind: input, shape index: {}]
  %s5 = inlined_call_operand.hbm [shape: bf16[16,128], index: 5, kind: output, shape index: {}]
  %s6 = sld [smem:[#allocation0]]
  $region81: #{tpu_custom_call.1} parent=0
    _
  %s8 = ssub.s32 1, %s6
  %s9 = scalar_select 0, %s8, %s6
  $region1: #{tpu_custom_call.1} parent=0
    #allocation3 [shape = 'u8[4096]{0}', space=vmem, size = 0x1000, scoped, tag = 'input window, operand 0']
    #allocation4 [shape = 's32[2]{0}', space=sflag, size = 0x8, scoped, tag = 'scoped memory for tpu_custom_call.1']
    #allocation5 [shape = 's32[2]{0}', space=sflag, size = 0x8, scoped, tag = 'scoped memory for tpu_custom_call.1']
    #allocation6 [shape = 'u8[8192]{0}', space=vmem, size = 0x2000, scoped, tag = 'input window, operand 1']
    #allocation7 [shape = 's32[2]{0}', space=sflag, size = 0x8, scoped, tag = 'scoped memory for tpu_custom_call.1']
    #allocation8 [shape = 'u8[4096]{0}', space=vmem, size = 0x1000, scoped, tag = 'input window, operand 2, single buffered']
    #allocation9 [shape = 'u8[512]{0}', space=vmem, size = 0x400, scoped, tag = 'input window, operand 3, single buffered']
    #allocation10 [shape = 's32[1]{0}', space=sflag, size = 0x4, scoped, tag = 'scoped memory for tpu_custom_call.1']
    #allocation11 [shape = 'u8[32768]{0}', space=vmem, size = 0x8000, scoped, tag = 'input window, operand 4, single buffered']
    #allocation12 [shape = 'u8[4096]{0}', space=vmem, size = 0x1000, scoped, tag = 'output window, operand 0']
    %10 = vsyncpa [#allocation4], 0
    %s11 = scalar_lea.sflag [#allocation4], 1
    %12 = vsyncpa %s11, 0
    %13 = vsyncpa [#allocation7], 0
    %s14 = scalar_lea.sflag [#allocation7], 1
    %15 = vsyncpa %s14, 0
    %16 = vsyncpa [#allocation10], 0
    %17 = vsyncpa [#allocation5], 0
    %s18 = scalar_lea.sflag [#allocation5], 1
    %19 = vsyncpa %s18, 0
    loop: start=0, step=1, limit=4
    $region2: #{tpu_custom_call.1} parent=1 // loop_pre_header
      _
    $region3: #{tpu_custom_call.1} parent=1 // loop_header
      %s21 = sphi 0, %s25
      %p22 = scmp.ge.s32.totalorder %s21, 4
      %s28 = sphi 0, %s40
      %s29 = sphi 0, %s36
      %s30 = sphi 0, %s28
      %s31 = sphi 0, %s29
      %s32 = sphi 0, %s30
      %s33 = sphi 0, %s31
      %s45 = sphi 0, %s47
      %s48 = sphi 0, %s45
      %s49 = sphi 0, %s48
      %s65 = sphi 0, %s49
      %s71 = sphi 0, %s73
      %s74 = sphi 0, %s71
      %s75 = sphi 0, %s74
      %s91 = sphi 0, %s75
      %s97 = sphi 0, %s99
      %s100 = sphi 0, %s97
      %s101 = sphi 0, %s100
      %s117 = sphi 0, %s101
      %s121 = sphi 0, %s121
      %s123 = sphi 0, %s121
      %s124 = sphi 0, %s123
      %s138 = sphi 0, %s124
      %s142 = sphi 0, %s142
      %s144 = sphi 0, %s142
      %s145 = sphi 0, %s144
      %s159 = sphi 0, %s145
      %s165 = sphi 0, %s167
      %s168 = sphi 0, %s165
      %s169 = sphi 0, %s168
      %s185 = sphi 0, %s169
    $region4: #{tpu_custom_call.1} parent=1 // loop_header_branch
      %24 = sbr.rel (%p22) target = $region8
    $region5: #{tpu_custom_call.1} parent=1 // loop_body
      %s26 = ssub.s32 %s21, 1
      %s27 = ssub.s32 %s21, 2
      %s34 = sadd.s32 1, %s29
      %p35 = scmp.ge.s32.totalorder %s34, 1
      %s36 = scalar_select %p35, 0, %s34
      %s37 = sadd.s32 1, %s28
      %s38 = scalar_select %p35, %s37, %s28
      %p39 = scmp.ge.s32.totalorder %s38, 2
      %s40 = scalar_select %p39, 0, %s38
      %s41 = ssub.s32 %s28, %s40
      %s42 = ssub.s32 %s29, %s36
      %s43 = sor.u32 %s41, %s42
      %p44 = scmp.eq.s32.totalorder %s43, 0
      %s46 = sadd.s32 %s45, 1
      %s47 = scalar_select %p44, %s45, %s46
      %p50 = pneg %p44
      %p51 = scmp.eq.s32.totalorder %s21, 1
      %p52 = por %p50, %p51
      %p53 = scmp.ne.s32.totalorder %s45, %s48
      %p54 = scmp.eq.s32.totalorder %s21, 0
      %p55 = por %p53, %p54
      %p56 = scmp.ne.s32.totalorder %s45, %s48
      %p57 = scmp.eq.s32.totalorder %s26, 1
      %p58 = por %p56, %p57
      %p59 = scmp.ne.s32.totalorder %s48, %s49
      %p60 = scmp.eq.s32.totalorder %s26, 0
      %p61 = por %p59, %p60
      %p62 = scmp.ne.s32.totalorder %s48, %s49
      %p63 = scmp.eq.s32.totalorder %s27, 1
      %p64 = por %p62, %p63
      %p66 = scmp.ne.s32.totalorder %s49, %s65
      %p67 = scmp.eq.s32.totalorder %s27, 0
      %p68 = por %p66, %p67
      %s69 = ssub.s32 %s28, %s40
      %p70 = scmp.eq.s32.totalorder %s69, 0
      %s72 = sadd.s32 %s71, 1
      %s73 = scalar_select %p70, %s71, %s72
      %p76 = pneg %p70
      %p77 = scmp.eq.s32.totalorder %s21, 1
      %p78 = por %p76, %p77
      %p79 = scmp.ne.s32.totalorder %s71, %s74
      %p80 = scmp.eq.s32.totalorder %s21, 0
      %p81 = por %p79, %p80
      %p82 = scmp.ne.s32.totalorder %s71, %s74
      %p83 = scmp.eq.s32.totalorder %s26, 1
      %p84 = por %p82, %p83
      %p85 = scmp.ne.s32.totalorder %s74, %s75
      %p86 = scmp.eq.s32.totalorder %s26, 0
      %p87 = por %p85, %p86
      %p88 = scmp.ne.s32.totalorder %s74, %s75
      %p89 = scmp.eq.s32.totalorder %s27, 1
      %p90 = por %p88, %p89
      %p92 = scmp.ne.s32.totalorder %s75, %s91
      %p93 = scmp.eq.s32.totalorder %s27, 0
      %p94 = por %p92, %p93
      %s95 = ssub.s32 %s29, %s36
      %p96 = scmp.eq.s32.totalorder %s95, 0
      %s98 = sadd.s32 %s97, 1
      %s99 = scalar_select %p96, %s97, %s98
      %p102 = pneg %p96
      %p103 = scmp.eq.s32.totalorder %s21, 1
      %p104 = por %p102, %p103
      %p105 = scmp.ne.s32.totalorder %s97, %s100
      %p106 = scmp.eq.s32.totalorder %s21, 0
      %p107 = por %p105, %p106
      %p108 = scmp.ne.s32.totalorder %s97, %s100
      %p109 = scmp.eq.s32.totalorder %s26, 1
      %p110 = por %p108, %p109
      %p111 = scmp.ne.s32.totalorder %s100, %s101
      %p112 = scmp.eq.s32.totalorder %s26, 0
      %p113 = por %p111, %p112
      %p114 = scmp.ne.s32.totalorder %s100, %s101
      %p115 = scmp.eq.s32.totalorder %s27, 1
      %p116 = por %p114, %p115
      %p118 = scmp.ne.s32.totalorder %s101, %s117
      %p119 = scmp.eq.s32.totalorder %s27, 0
      %p120 = por %p118, %p119
      %s122 = sadd.s32 %s121, 1
      %p125 = scmp.eq.s32.totalorder %s21, 1
      %p126 = scmp.ne.s32.totalorder %s121, %s123
      %p127 = scmp.eq.s32.totalorder %s21, 0
      %p128 = por %p126, %p127
      %p129 = scmp.ne.s32.totalorder %s121, %s123
      %p130 = scmp.eq.s32.totalorder %s26, 1
      %p131 = por %p129, %p130
      %p132 = scmp.ne.s32.totalorder %s123, %s124
      %p133 = scmp.eq.s32.totalorder %s26, 0
      %p134 = por %p132, %p133
      %p135 = scmp.ne.s32.totalorder %s123, %s124
      %p136 = scmp.eq.s32.totalorder %s27, 1
      %p137 = por %p135, %p136
      %p139 = scmp.ne.s32.totalorder %s124, %s138
      %p140 = scmp.eq.s32.totalorder %s27, 0
      %p141 = por %p139, %p140
      %s143 = sadd.s32 %s142, 1
      %p146 = scmp.eq.s32.totalorder %s21, 1
      %p147 = scmp.ne.s32.totalorder %s142, %s144
      %p148 = scmp.eq.s32.totalorder %s21, 0
      %p149 = por %p147, %p148
      %p150 = scmp.ne.s32.totalorder %s142, %s144
      %p151 = scmp.eq.s32.totalorder %s26, 1
      %p152 = por %p150, %p151
      %p153 = scmp.ne.s32.totalorder %s144, %s145
      %p154 = scmp.eq.s32.totalorder %s26, 0
      %p155 = por %p153, %p154
      %p156 = scmp.ne.s32.totalorder %s144, %s145
      %p157 = scmp.eq.s32.totalorder %s27, 1
      %p158 = por %p156, %p157
      %p160 = scmp.ne.s32.totalorder %s145, %s159
      %p161 = scmp.eq.s32.totalorder %s27, 0
      %p162 = por %p160, %p161
      %s163 = ssub.s32 %s28, %s40
      %p164 = scmp.eq.s32.totalorder %s163, 0
      %s166 = sadd.s32 %s165, 1
      %s167 = scalar_select %p164, %s165, %s166
      %p170 = pneg %p164
      %p171 = scmp.eq.s32.totalorder %s21, 1
      %p172 = por %p170, %p171
      %p173 = scmp.ne.s32.totalorder %s165, %s168
      %p174 = scmp.eq.s32.totalorder %s21, 0
      %p175 = por %p173, %p174
      %p176 = scmp.ne.s32.totalorder %s165, %s168
      %p177 = scmp.eq.s32.totalorder %s26, 1
      %p178 = por %p176, %p177
      %p179 = scmp.ne.s32.totalorder %s168, %s169
      %p180 = scmp.eq.s32.totalorder %s26, 0
      %p181 = por %p179, %p180
      %p182 = scmp.ne.s32.totalorder %s168, %s169
      %p183 = scmp.eq.s32.totalorder %s27, 1
      %p184 = por %p182, %p183
      %p186 = scmp.ne.s32.totalorder %s169, %s185
      %p187 = scmp.eq.s32.totalorder %s27, 0
      %p188 = por %p186, %p187
      %p189 = scmp.le.s32.totalorder 1, %s21
      %p190 = scmp.lt.s32.totalorder %s21, 3
      %p191 = pnand %p189, %p190
      %p192 = pneg %p191
      // Predicated region
      $region9: #{tpu_custom_call.1} parent=5 // pred_check
        _
      $region10: #{tpu_custom_call.1} parent=5 // pred_check_branch
        %194 = sbr.rel (%p191) target = $region12
      $region11: #{tpu_custom_call.1} parent=5 // pred_region
        %s195 = ssub.s32 %s21, 1
        // Predicated region
        $region13: #{tpu_custom_call.1} parent=11 // pred_check
          %p196 = pneg %p113
        $region14: #{tpu_custom_call.1} parent=11 // pred_check_branch
          %198 = sbr.rel (%p196) target = $region16
        $region15: #{tpu_custom_call.1} parent=11 // pred_region
          %s199 = smul.u32 2, %s31
          %s201 = ssub.s32 128, 128
          %202 = vsyncadd [#allocation7], %s201
          %s203 = smul.addr %s199, 64
          %s204 = scalar_lea.hbm %s2, %s203
          %s205 = sshll.u32 [#allocation8], 4
          %s206 = int_to_ptr.vmem [resolvable:$true] %s205
          %211 = dma.hbm_to_vmem [thread:$0]  %s204, 128, %s206, [#allocation7], 64, 64, 4
        $region16: #{tpu_custom_call.1} parent=11 // pred_fallthru
          _
        // Predicated region
        $region17: #{tpu_custom_call.1} parent=11 // pred_check
          %p212 = pneg %p134
        $region18: #{tpu_custom_call.1} parent=11 // pred_check_branch
          %214 = sbr.rel (%p212) target = $region20
        $region19: #{tpu_custom_call.1} parent=11 // pred_region
          %s216 = ssub.s32 16, 16
          %217 = vsyncadd [#allocation10], %s216
          %s219 = sshll.u32 [#allocation9], 4
          %s220 = int_to_ptr.vmem [resolvable:$true] %s219
          %222 = dma.hbm_to_vmem [thread:$0]  %s3, 16, %s220, [#allocation10]
        $region20: #{tpu_custom_call.1} parent=11 // pred_fallthru
          _
        // Predicated region
        $region21: #{tpu_custom_call.1} parent=11 // pred_check
          %p223 = pneg %p155
        $region22: #{tpu_custom_call.1} parent=11 // pred_check_branch
          %225 = sbr.rel (%p223) target = $region24
        $region23: #{tpu_custom_call.1} parent=11 // pred_region
          %s227 = ssub.s32 1024, 1024
          %228 = vsyncadd [#allocation10], %s227
          %s229 = sshll.u32 [#allocation11], 4
          %s230 = int_to_ptr.vmem [resolvable:$true] %s229
          %235 = dma.hbm_to_vmem [thread:$0]  %s4, 1024, %s230, [#allocation10], 64, 64, 4
        $region24: #{tpu_custom_call.1} parent=11 // pred_fallthru
          _
      $region12: #{tpu_custom_call.1} parent=5 // pred_fallthru
        _
      %p236 = scmp.lt.s32.totalorder %s21, 2
      // Predicated region
      $region25: #{tpu_custom_call.1} parent=5 // pred_check
        %p237 = pneg %p236
      $region26: #{tpu_custom_call.1} parent=5 // pred_check_branch
        %239 = sbr.rel (%p237) target = $region28
      $region27: #{tpu_custom_call.1} parent=5 // pred_region
        // Predicated region
        $region29: #{tpu_custom_call.1} parent=27 // pred_check
          %p240 = pneg %p55
        $region30: #{tpu_custom_call.1} parent=27 // pred_check_branch
          %242 = sbr.rel (%p240) target = $region32
        $region31: #{tpu_custom_call.1} parent=27 // pred_region
          %s243 = sand.u32 %s45, 1
          %s244 = scalar_lea.sflag [#allocation4], %s243
          %s245 = sand.u32 %s45, 1
          %s246 = smul.addr %s245, 4
          %s247 = scalar_lea.vmem [#allocation3], %s246
          %s249 = ssub.s32 64, 64
          %250 = vsyncadd %s244, %s249
          %s251 = sadd.s32 %s29, %s28
          %s252 = smul.addr %s251, 64
          %s253 = scalar_lea.hbm %s0, %s252
          %s255 = sshll.u32 %s247, 4
          %s256 = int_to_ptr.vmem [resolvable:$true] %s255
          %258 = dma.hbm_to_vmem [thread:$0]  %s253, 64, %s256, %s244
        $region32: #{tpu_custom_call.1} parent=27 // pred_fallthru
          _
        // Predicated region
        $region33: #{tpu_custom_call.1} parent=27 // pred_check
          %p259 = pneg %p81
        $region34: #{tpu_custom_call.1} parent=27 // pred_check_branch
          %261 = sbr.rel (%p259) target = $region36
        $region35: #{tpu_custom_call.1} parent=27 // pred_region
          %s262 = sand.u32 %s21, 1
          %s263 = scalar_lea.sflag [#allocation7], %s262
          %s264 = sand.u32 %s71, 1
          %s265 = smul.addr %s264, 8
          %s266 = scalar_lea.vmem [#allocation6], %s265
          %s268 = ssub.s32 128, 128
          %269 = vsyncadd %s263, %s268
          %s270 = smul.addr %s28, 128
          %s271 = scalar_lea.hbm %s1, %s270
          %s273 = sshll.u32 %s266, 4
          %s274 = int_to_ptr.vmem [resolvable:$true] %s273
          %276 = dma.hbm_to_vmem [thread:$0]  %s271, 128, %s274, %s263
        $region36: #{tpu_custom_call.1} parent=27 // pred_fallthru
          _
      $region28: #{tpu_custom_call.1} parent=5 // pred_fallthru
        _
      %p277 = scmp.le.s32.totalorder 1, %s21
      %p278 = scmp.lt.s32.totalorder %s21, 3
      %p279 = pnand %p277, %p278
      %p280 = pneg %p279
      // Predicated region
      $region37: #{tpu_custom_call.1} parent=5 // pred_check
        _
      $region38: #{tpu_custom_call.1} parent=5 // pred_check_branch
        %282 = sbr.rel (%p279) target = $region40
      $region39: #{tpu_custom_call.1} parent=5 // pred_region
        %s283 = ssub.s32 %s21, 1
        %s284 = sand.u32 %s48, 1
        %s285 = scalar_lea.sflag [#allocation4], %s284
        %s286 = sand.u32 %s48, 1
        %s287 = smul.addr %s286, 4
        %s288 = scalar_lea.vmem [#allocation3], %s287
        // Predicated region
        $region41: #{tpu_custom_call.1} parent=39 // pred_check
          %p289 = pneg %p61
        $region42: #{tpu_custom_call.1} parent=39 // pred_check_branch
          %291 = sbr.rel (%p289) target = $region44
        $region43: #{tpu_custom_call.1} parent=39 // pred_region
          %292 = dma.done %s285, 64
        $region44: #{tpu_custom_call.1} parent=39 // pred_fallthru
          _
        %s293 = sand.u32 %s26, 1
        %s294 = scalar_lea.sflag [#allocation7], %s293
        %s295 = sand.u32 %s74, 1
        %s296 = smul.addr %s295, 8
        %s297 = scalar_lea.vmem [#allocation6], %s296
        // Predicated region
        $region45: #{tpu_custom_call.1} parent=39 // pred_check
          %p298 = pneg %p87
        $region46: #{tpu_custom_call.1} parent=39 // pred_check_branch
          %300 = sbr.rel (%p298) target = $region48
        $region47: #{tpu_custom_call.1} parent=39 // pred_region
          %301 = dma.done %s294, 128
        $region48: #{tpu_custom_call.1} parent=39 // pred_fallthru
          _
        // Predicated region
        $region49: #{tpu_custom_call.1} parent=39 // pred_check
          %p302 = pneg %p113
        $region50: #{tpu_custom_call.1} parent=39 // pred_check_branch
          %304 = sbr.rel (%p302) target = $region52
        $region51: #{tpu_custom_call.1} parent=39 // pred_region
          %305 = dma.done [#allocation7], 128
        $region52: #{tpu_custom_call.1} parent=39 // pred_fallthru
          _
        // Predicated region
        $region53: #{tpu_custom_call.1} parent=39 // pred_check
          %p306 = pneg %p134
        $region54: #{tpu_custom_call.1} parent=39 // pred_check_branch
          %308 = sbr.rel (%p306) target = $region56
        $region55: #{tpu_custom_call.1} parent=39 // pred_region
          %309 = dma.done [#allocation10], 16
        $region56: #{tpu_custom_call.1} parent=39 // pred_fallthru
          _
        // Predicated region
        $region57: #{tpu_custom_call.1} parent=39 // pred_check
          %p310 = pneg %p155
        $region58: #{tpu_custom_call.1} parent=39 // pred_check_branch
          %312 = sbr.rel (%p310) target = $region60
        $region59: #{tpu_custom_call.1} parent=39 // pred_region
          %313 = dma.done [#allocation10], 1024
        $region60: #{tpu_custom_call.1} parent=39 // pred_fallthru
          _
        %s314 = sand.u32 %s48, 1
        %s315 = scalar_lea.sflag [#allocation4], %s314
        %s316 = sand.u32 %s48, 1
        %s317 = smul.addr %s316, 4
        %s318 = scalar_lea.vmem [#allocation3], %s317
        %p319 = pneg %p61
        %p320 = pneg %p58
        %s321 = sand.u32 %s26, 1
        %s322 = scalar_lea.sflag [#allocation7], %s321
        %s323 = sand.u32 %s74, 1
        %s324 = smul.addr %s323, 8
        %s325 = scalar_lea.vmem [#allocation6], %s324
        %p326 = pneg %p87
        %p327 = pneg %p84
        %p328 = pneg %p113
        %p329 = pneg %p110
        %p330 = pneg %p134
        %p331 = pneg %p131
        %p332 = pneg %p155
        %p333 = pneg %p152
        %p334 = pneg %p181
        %p335 = pneg %p178
        %s336 = sand.u32 %s168, 1
        %s337 = scalar_lea.sflag [#allocation5], %s336
        %s338 = sand.u32 %s168, 1
        %s339 = smul.addr %s338, 4
        %s340 = scalar_lea.vmem [#allocation12], %s339
        %s341 = smul.u32 2, %s31
        %p343 = scmp.eq.s32.totalorder %s31, 0
        // Predicated region
        $region61: #{tpu_custom_call.1} parent=39 // pred_check
          %p344 = pneg %p343
        $region62: #{tpu_custom_call.1} parent=39 // pred_check_branch
          %346 = sbr.rel (%p344) target = $region64
        $region63: #{tpu_custom_call.1} parent=39 // pred_region
          %347 = vst [vmem:[#allocation2] sm:$0xff] 0.0
        $region64: #{tpu_custom_call.1} parent=39 // pred_fallthru
          _
        %v348 = vld [vmem:[#allocation2] sm:$0xff]
        %v349 = vld [vmem:[%s288] sm:$0xf]
        %v350 = vld [vmem:[#allocation8] sm:$0xf]
        %v351 = vld [vmem:[#allocation8 + $0x4] sm:$0xf]
        %v354 = vunpack.c.l.b16 %v350
        %v355 = vunpack.c.l.b16 %v351
        %v356 = vpack.c.b16 %v355, %v354
        %vm358 = vcmask 130048
        %v360 = vsel %vm358, %v349, 0
        %362 = vmatprep.subr.bf16.mxu0 0
        %363 = vmatpush1.bf16.msra.mxu0 %v356
        %364 = vmatprep.subr.bf16.mxu0 0
        %365 = vmatpush1.bf16.msra.mxu0 0
        %366 = vmatprep.subr.bf16.mxu0 0
        %367 = vmatpush1.bf16.msra.mxu0 0
        %368 = vmatprep.subr.bf16.mxu0 0
        %369 = vmatpush1.bf16.msra.mxu0 0
        %370 = vmatprep.subr.bf16.mxu0 0
        %371 = vmatpush1.bf16.msra.mxu0 0
        %372 = vmatprep.subr.bf16.mxu0 0
        %373 = vmatpush1.bf16.msra.mxu0 0
        %374 = vmatprep.subr.bf16.mxu0 0
        %375 = vmatpush1.bf16.msra.mxu0 0
        %376 = vmatprep.subr.bf16.mxu0 0
        %377 = vmatpush1.bf16.msra.mxu0 0
        %378 = vmatprep.subr.bf16.mxu0 0
        %379 = vmatpush1.bf16.msra.mxu0 0
        %380 = vmatprep.subr.bf16.mxu0 0
        %381 = vmatpush1.bf16.msra.mxu0 0
        %382 = vmatprep.subr.bf16.mxu0 0
        %383 = vmatpush1.bf16.msra.mxu0 0
        %384 = vmatprep.subr.bf16.mxu0 0
        %385 = vmatpush1.bf16.msra.mxu0 0
        %386 = vmatprep.subr.bf16.mxu0 0
        %387 = vmatpush1.bf16.msra.mxu0 0
        %388 = vmatprep.subr.bf16.mxu0 0
        %389 = vmatpush1.bf16.msra.mxu0 0
        %390 = vmatprep.subr.bf16.mxu0 0
        %391 = vmatpush1.bf16.msra.mxu0 0
        %392 = vmatprep.subr.bf16.mxu0 0
        %393 = vmatpush1.bf16.msra.mxu0 0
        %394 = vmatprep.mubr.bf16.mxu0 0
        %395 = vmatmul.mubr.bf16.gmra.mrb[0].mxu0 %v360
        %v396 = vpop.f32.mrb[0].mxu0
        %v397 = vadd.f32 0.0, %v396
        %v398 = vpop.f32.mrb[0].mxu0
        %v399 = vpop.f32.mrb[0].mxu0
        %v400 = vpop.f32.mrb[0].mxu0
        %401 = vdwg.mxu0
        %v402 = vadd.f32 %v348, %v397
        %403 = vst [vmem:[#allocation2] sm:$0xff] %v402
        // Predicated region
        $region65: #{tpu_custom_call.1} parent=39 // pred_check
          %p404 = pneg %p343
        $region66: #{tpu_custom_call.1} parent=39 // pred_check_branch
          %406 = sbr.rel (%p404) target = $region68
        $region67: #{tpu_custom_call.1} parent=39 // pred_region
          %v407 = vld [vmem:[#allocation2] sm:$0xff]
          %v408 = vld [vmem:[%s297] sm:$0xff]
          %410 = vset.pattern.permute.xlu0 0
          %411 = vperm.xlu0 %410, %v408
          %v412 = vpop.permute.xlu0 %411
          %v414 = vmul.f32 %v407, %v412
          %v415 = vld [vmem:[#allocation9] sm:$0x1]
          %v417 = vlaneseq
          %v418 = vshrl.u32 %v417, 7
          %v419 = vsub.s32 0, %v418
          %v420 = vrot.slane %v415, %v419
          %v422 = vadd.f32 %v414, %v420
          %v423 = vmax.f32 %v422, 0.0
          %v424 = vpack.c.bf16 %v423, %v423
          %v425 = vld [vmem:[#allocation11] sm:$0xf]
          %v426 = vld [vmem:[#allocation11 + $0x4] sm:$0xf]
          %v427 = vld [vmem:[#allocation11 + $0x8] sm:$0xf]
          %v428 = vld [vmem:[#allocation11 + $0xc] sm:$0xf]
          %v429 = vld [vmem:[#allocation11 + $0x10] sm:$0xf]
          %v430 = vld [vmem:[#allocation11 + $0x14] sm:$0xf]
          %v431 = vld [vmem:[#allocation11 + $0x18] sm:$0xf]
          %v432 = vld [vmem:[#allocation11 + $0x1c] sm:$0xf]
          %v433 = vld [vmem:[#allocation11 + $0x20] sm:$0xf]
          %v434 = vld [vmem:[#allocation11 + $0x24] sm:$0xf]
          %v435 = vld [vmem:[#allocation11 + $0x28] sm:$0xf]
          %v436 = vld [vmem:[#allocation11 + $0x2c] sm:$0xf]
          %v437 = vld [vmem:[#allocation11 + $0x30] sm:$0xf]
          %v438 = vld [vmem:[#allocation11 + $0x34] sm:$0xf]
          %v439 = vld [vmem:[#allocation11 + $0x38] sm:$0xf]
          %v440 = vld [vmem:[#allocation11 + $0x3c] sm:$0xf]
          %v457 = vunpack.c.l.b16 %v425
          %v458 = vunpack.c.l.b16 %v426
          %v459 = vunpack.c.l.b16 %v427
          %v460 = vunpack.c.l.b16 %v428
          %v461 = vunpack.c.l.b16 %v429
          %v462 = vunpack.c.l.b16 %v430
          %v463 = vunpack.c.l.b16 %v431
          %v464 = vunpack.c.l.b16 %v432
          %v465 = vunpack.c.l.b16 %v433
          %v466 = vunpack.c.l.b16 %v434
          %v467 = vunpack.c.l.b16 %v435
          %v468 = vunpack.c.l.b16 %v436
          %v469 = vunpack.c.l.b16 %v437
          %v470 = vunpack.c.l.b16 %v438
          %v471 = vunpack.c.l.b16 %v439
          %v472 = vunpack.c.l.b16 %v440
          %v473 = vpack.c.b16 %v458, %v457
          %v474 = vpack.c.b16 %v460, %v459
          %v475 = vpack.c.b16 %v462, %v461
          %v476 = vpack.c.b16 %v464, %v463
          %v477 = vpack.c.b16 %v466, %v465
          %v478 = vpack.c.b16 %v468, %v467
          %v479 = vpack.c.b16 %v470, %v469
          %v480 = vpack.c.b16 %v472, %v471
          %489 = vmatprep.subr.bf16.mxu0 0
          %490 = vmatpush1.bf16.msra.mxu0 %v473
          %491 = vmatprep.subr.bf16.mxu0 0
          %492 = vmatpush1.bf16.msra.mxu0 %v474
          %493 = vmatprep.subr.bf16.mxu0 0
          %494 = vmatpush1.bf16.msra.mxu0 %v475
          %495 = vmatprep.subr.bf16.mxu0 0
          %496 = vmatpush1.bf16.msra.mxu0 %v476
          %497 = vmatprep.subr.bf16.mxu0 0
          %498 = vmatpush1.bf16.msra.mxu0 %v477
          %499 = vmatprep.subr.bf16.mxu0 0
          %500 = vmatpush1.bf16.msra.mxu0 %v478
          %501 = vmatprep.subr.bf16.mxu0 0
          %502 = vmatpush1.bf16.msra.mxu0 %v479
          %503 = vmatprep.subr.bf16.mxu0 0
          %504 = vmatpush1.bf16.msra.mxu0 %v480
          %505 = vmatprep.subr.bf16.mxu0 0
          %506 = vmatpush1.bf16.msra.mxu0 0
          %507 = vmatprep.subr.bf16.mxu0 0
          %508 = vmatpush1.bf16.msra.mxu0 0
          %509 = vmatprep.subr.bf16.mxu0 0
          %510 = vmatpush1.bf16.msra.mxu0 0
          %511 = vmatprep.subr.bf16.mxu0 0
          %512 = vmatpush1.bf16.msra.mxu0 0
          %513 = vmatprep.subr.bf16.mxu0 0
          %514 = vmatpush1.bf16.msra.mxu0 0
          %515 = vmatprep.subr.bf16.mxu0 0
          %516 = vmatpush1.bf16.msra.mxu0 0
          %517 = vmatprep.subr.bf16.mxu0 0
          %518 = vmatpush1.bf16.msra.mxu0 0
          %519 = vmatprep.subr.bf16.mxu0 0
          %520 = vmatpush1.bf16.msra.mxu0 0
          %521 = vmatprep.mubr.bf16.mxu0 0
          %522 = vmatmul.mubr.bf16.gmra.mrb[0].mxu0 %v424
          %v523 = vpop.f32.mrb[0].mxu0
          %v524 = vadd.f32 0.0, %v523
          %v525 = vpop.f32.mrb[0].mxu0
          %v526 = vpop.f32.mrb[0].mxu0
          %v527 = vpop.f32.mrb[0].mxu0
          %528 = vdwg.mxu0
          %v529 = vmul.f32 %v524, %v412
          %v530 = vpack.c.bf16 %v529, %v529
          %531 = vst [vmem:[%s340] sm:$0xf] %v530
        $region68: #{tpu_custom_call.1} parent=39 // pred_fallthru
          _
        %s532 = sand.u32 %s168, 1
        %s533 = scalar_lea.sflag [#allocation5], %s532
        %s534 = sand.u32 %s168, 1
        %s535 = smul.addr %s534, 4
        %s536 = scalar_lea.vmem [#allocation12], %s535
        // Predicated region
        $region69: #{tpu_custom_call.1} parent=39 // pred_check
          %p537 = pneg %p178
        $region70: #{tpu_custom_call.1} parent=39 // pred_check_branch
          %539 = sbr.rel (%p537) target = $region72
        $region71: #{tpu_custom_call.1} parent=39 // pred_region
          %s541 = ssub.s32 64, 64
          %542 = vsyncadd %s533, %s541
          %s543 = smul.addr %s30, 64
          %s544 = scalar_lea.hbm %s5, %s543
          %s546 = sshll.u32 %s536, 4
          %s547 = int_to_ptr.vmem [resolvable:$true] %s546
          %549 = dma.vmem_to_hbm [thread:$0]  %s547, 64, %s544, %s533
        $region72: #{tpu_custom_call.1} parent=39 // pred_fallthru
          _
      $region40: #{tpu_custom_call.1} parent=5 // pred_fallthru
        _
      %p550 = scmp.le.s32.totalorder 2, %s21
      // Predicated region
      $region73: #{tpu_custom_call.1} parent=5 // pred_check
        %p551 = pneg %p550
      $region74: #{tpu_custom_call.1} parent=5 // pred_check_branch
        %553 = sbr.rel (%p551) target = $region76
      $region75: #{tpu_custom_call.1} parent=5 // pred_region
        %s554 = ssub.s32 %s21, 2
        // Predicated region
        $region77: #{tpu_custom_call.1} parent=75 // pred_check
          %p555 = pneg %p184
        $region78: #{tpu_custom_call.1} parent=75 // pred_check_branch
          %557 = sbr.rel (%p555) target = $region80
        $region79: #{tpu_custom_call.1} parent=75 // pred_region
          %s558 = sand.u32 %s169, 1
          %s559 = scalar_lea.sflag [#allocation5], %s558
          %s560 = sand.u32 %s169, 1
          %s561 = smul.addr %s560, 4
          %s562 = scalar_lea.vmem [#allocation12], %s561
          %563 = dma.done %s559, 64
        $region80: #{tpu_custom_call.1} parent=75 // pred_fallthru
          _
      $region76: #{tpu_custom_call.1} parent=5 // pred_fallthru
        _
    $region6: #{tpu_custom_call.1} parent=1 // loop_footer
      %s25 = sadd.s32 1, %s21
    $region7: #{tpu_custom_call.1} parent=1 // loop_footer_branch
      %20 = sbr.rel target = $region3
    $region8: #{tpu_custom_call.1} parent=1 // loop_exit
      _
    %564 = vsyncpa [#allocation4], 1
    %s565 = scalar_lea.sflag [#allocation4], 1
    %566 = vsyncpa %s565, 1
    %567 = vsyncpa [#allocation7], 1
    %s568 = scalar_lea.sflag [#allocation7], 1
    %569 = vsyncpa %s568, 1
    %570 = vsyncpa [#allocation10], 1
    %571 = vsyncpa [#allocation5], 1
    %s572 = scalar_lea.sflag [#allocation5], 1
    %573 = vsyncpa %s572, 1

</llo_original>
